<compile_context>
chip_gen: v6e
topology: v6e:2x2x1
jax: 0.10.0
libtpu: 0.0.40
codegen_flags: <defaults>
</compile_context>

<pallas_src>
import functools

import jax
import jax.numpy as jnp
from jax import lax
from jax.experimental import pallas as pl
from jax.experimental.pallas import tpu as pltpu

IGNORE_INDEX = -100


# ----------------------------------------------------------------------------
# Fused kernel: per-(batch, seq-tile) cross-entropy partials + masked L1
# partials, accumulated into per-batch (1,1,1) output blocks over the
# sequence-tile ("arbitrary") grid axis.
# ----------------------------------------------------------------------------
def _loss_kernel(logits_ref, labels_ref, nlog_ref, nlab_ref,
                 loss_sum_ref, tok_cnt_ref, l1_sum_ref, l1_cnt_ref):
    j = pl.program_id(1)

    @pl.when(j == 0)
    def _():
        loss_sum_ref[...] = jnp.zeros_like(loss_sum_ref)
        tok_cnt_ref[...] = jnp.zeros_like(tok_cnt_ref)
        l1_sum_ref[...] = jnp.zeros_like(l1_sum_ref)
        l1_cnt_ref[...] = jnp.zeros_like(l1_cnt_ref)

    # ---------------- cross entropy on this (tm, V) tile ----------------
    logits = logits_ref[0].astype(jnp.float32)        # (tm, V)
    labels = labels_ref[0]                            # (tm, 1) int32
    valid = labels != IGNORE_INDEX                    # (tm, 1) bool

    m = jnp.max(logits, axis=-1, keepdims=True)       # (tm, 1)
    shifted = logits - m                              # reused for exp + pick
    sum_exp = jnp.sum(jnp.exp(shifted), axis=-1, keepdims=True)

    # gather logit at the label index via iota-compare (no dynamic gather);
    # picked - lse == picked_shifted - log(sum_exp)
    iota = lax.broadcasted_iota(jnp.int32, shifted.shape, 1)
    picked_shifted = jnp.sum(jnp.where(iota == labels, shifted, 0.0),
                             axis=-1, keepdims=True)  # (tm, 1)

    # Select (not multiply) so garbage rows from ragged/out-of-bounds tiles
    # (which always carry IGNORE_INDEX labels) cannot leak NaN/Inf.
    loss_row = jnp.where(valid, jnp.log(sum_exp) - picked_shifted, 0.0)

    loss_sum_ref[...] += jnp.sum(loss_row, keepdims=True)[None]          # (1,1,1)
    tok_cnt_ref[...] += jnp.sum(valid.astype(jnp.float32),
                                keepdims=True)[None]

    # ---------------- masked L1 ("num") loss on this tile ----------------
    nlog = nlog_ref[0].astype(jnp.float32)             # (tm, 1)
    nlab = nlab_ref[0].astype(jnp.float32)             # (tm, 1)
    nmask = nlab != jnp.float32(IGNORE_INDEX)
    l1_row = jnp.where(nmask, jnp.abs(nlog - nlab), 0.0)

    l1_sum_ref[...] += jnp.sum(l1_row, keepdims=True)[None]
    l1_cnt_ref[...] += jnp.sum(nmask.astype(jnp.float32),
                               keepdims=True)[None]


def _choose_row_tile(vocab, seq, itemsize,
                     target_block_bytes=16 * 1024 * 1024):
    """Largest multiple-of-8 row tile whose (tm, V) block is <= ~16 MB.

    16 MB per buffer -> ~33 MB double-buffered for the logits stream, which
    fits v7x's 64 MiB VMEM and is well inside v5e/v6e's 128 MiB.
    (tm=128 at V=32001 f32; smaller vocab -> capped by the sequence length.)
    """
    tm = target_block_bytes // max(vocab * itemsize, 1)
    tm = max(8, (tm // 8) * 8)
    tm = min(tm, 1024)
    seq8 = ((seq + 7) // 8) * 8
    return min(tm, seq8)


# ----------------------------------------------------------------------------
# Module-equivalent forward
# ----------------------------------------------------------------------------
@functools.partial(jax.jit, static_argnames=("vocab_size",))
def copilot_criterions_num_forward(logits, num_logits, labels, num_labels,
                                   vocab_size):
    b, s, v = logits.shape
    assert v == vocab_size

    itemsize = jnp.dtype(logits.dtype).itemsize
    tm = _choose_row_tile(v, s, itemsize)
    s_tiles = pl.cdiv(s, tm)
    s_pad = s_tiles * tm

    # Next-token-shifted labels, padded with IGNORE_INDEX so that:
    #   (a) row s-1 of every batch never contributes (the CE "shift"),
    #   (b) any ragged rows in the last sequence tile (whose logits block
    #       reads are out-of-bounds padding) are masked out.
    # Only the tiny (B, S) arrays are touched here — the big logits tensor is
    # passed to the kernel untouched (single HBM pass).
    shift_labels = jnp.concatenate(
        [labels[:, 1:].astype(jnp.int32),
         jnp.full((b, 1), IGNORE_INDEX, dtype=jnp.int32)], axis=1)
    nlog = num_logits.astype(jnp.float32)
    nlab = num_labels.astype(jnp.float32)
    if s_pad != s:
        pad = ((0, 0), (0, s_pad - s))
        shift_labels = jnp.pad(shift_labels, pad,
                               constant_values=IGNORE_INDEX)
        nlog = jnp.pad(nlog, pad)
        nlab = jnp.pad(nlab, pad, constant_values=float(IGNORE_INDEX))
    shift_labels = shift_labels[..., None]    # (B, s_pad, 1)
    nlog = nlog[..., None]                    # (B, s_pad, 1)
    nlab = nlab[..., None]                    # (B, s_pad, 1)

    # VMEM budget: double-buffered logits blocks + (lane-padded) aux blocks.
    logits_blk_bytes = tm * v * itemsize
    aux_blk_bytes = 3 * tm * 128 * 4
    vmem_limit = int(max(2 * (logits_blk_bytes + aux_blk_bytes) + (2 << 20),
                         32 * 1024 * 1024))

    loss_sum, tok_cnt, l1_sum, l1_cnt = pl.pallas_call(
        _loss_kernel,
        out_shape=tuple(jax.ShapeDtypeStruct((b, 1, 1), jnp.float32)
                        for _ in range(4)),
        grid=(b, s_tiles),
        in_specs=[
            pl.BlockSpec((1, tm, v), lambda bi, j: (bi, j, 0)),
            pl.BlockSpec((1, tm, 1), lambda bi, j: (bi, j, 0)),
            pl.BlockSpec((1, tm, 1), lambda bi, j: (bi, j, 0)),
            pl.BlockSpec((1, tm, 1), lambda bi, j: (bi, j, 0)),
        ],
        out_specs=tuple(pl.BlockSpec((1, 1, 1), lambda bi, j: (bi, 0, 0))
                        for _ in range(4)),
        compiler_params=pltpu.CompilerParams(
            dimension_semantics=("parallel", "arbitrary"),
            vmem_limit_bytes=vmem_limit,
        ),
    )(logits, shift_labels, nlog, nlab)

    # ---- lm (cross entropy) loss: mean over non-ignored tokens ----
    # (NaN if every label is IGNORE_INDEX, matching PyTorch CE behavior.)
    lm_loss = jnp.sum(loss_sum) / jnp.sum(tok_cnt)

    # ---- num (masked L1) loss ----
    l1_total = jnp.sum(l1_sum)
    cnt_total = jnp.sum(l1_cnt)
    num_loss = jnp.where(cnt_total > 0,
                         l1_total / jnp.maximum(cnt_total, 1.0), l1_total)

    # ---- bce loss ----
    # self.mlp_bce is False in __init__, so this branch is a constant zero.
    # TODO(synk): mlp_bce=True branch (boolean-mask gather + BCEWithLogits) not implemented.
    bce_loss = jnp.float32(0.0)

    total_loss = lm_loss + num_loss + bce_loss
    loss_log = {"lm_loss": lm_loss, "num_loss": num_loss, "bce_loss": bce_loss}
    return total_loss, loss_log


# ----------------------------------------------------------------------------
# Pure-JAX reference (correctness self-check)
# ----------------------------------------------------------------------------
def _reference(logits, num_logits, labels, num_labels, vocab_size):
    shift_logits = logits[..., :-1, :].reshape(-1, vocab_size)
    shift_labels = labels[..., 1:].reshape(-1)
    valid = shift_labels != IGNORE_INDEX
    logz = jax.nn.logsumexp(shift_logits, axis=-1)
    picked = jnp.take_along_axis(
        shift_logits, jnp.maximum(shift_labels, 0)[:, None], axis=-1
    )[:, 0]
    per_tok = jnp.where(valid, logz - picked, 0.0)
    lm = jnp.sum(per_tok) / jnp.sum(valid)

    nlab = num_labels.reshape(-1)
    nlog = num_logits.reshape(-1)
    mask = nlab != float(IGNORE_INDEX)
    l1 = jnp.sum(jnp.abs(jnp.where(mask, nlog, 0.0) - jnp.where(mask, nlab, 0.0)))
    cnt = jnp.sum(mask)
    num = jnp.where(cnt > 0, l1 / jnp.maximum(cnt, 1), l1)
    return lm + num, lm, num


if __name__ == "__main__":
    B, S, V = 2, 8, 128  # small shapes; module default vocab (32001) scales the same way
    key = jax.random.PRNGKey(0)
    k1, k2, k3, k4, k5, k6 = jax.random.split(key, 6)

    logits = jax.random.normal(k1, (B, S, V), dtype=jnp.float32)
    num_logits = jax.random.normal(k2, (B, S), dtype=jnp.float32)

    labels = jax.random.randint(k3, (B, S), 0, V, dtype=jnp.int32)
    # sprinkle some ignore_index tokens
    ign_mask = jax.random.uniform(k4, (B, S)) < 0.25
    labels = jnp.where(ign_mask, IGNORE_INDEX, labels)

    num_labels = jax.random.normal(k5, (B, S), dtype=jnp.float32)
    num_ign = jax.random.uniform(k6, (B, S)) < 0.5
    num_labels = jnp.where(num_ign, float(IGNORE_INDEX), num_labels)

    total, log = copilot_criterions_num_forward(
        logits, num_logits, labels, num_labels, V
    )
    total = jax.block_until_ready(total)

    ref_total, ref_lm, ref_num = _reference(
        logits, num_logits, labels, num_labels, V
    )
    assert jnp.allclose(total, ref_total, rtol=1e-5, atol=1e-5), (total, ref_total)
    assert jnp.allclose(log["lm_loss"], ref_lm, rtol=1e-5, atol=1e-5)
    assert jnp.allclose(log["num_loss"], ref_num, rtol=1e-5, atol=1e-5)

    print("KERNEL_OK")
</pallas_src>

<mosaic_0001>
module attributes {stable_mosaic.version = 11 : i64} {
  func.func @_loss_kernel(%arg0: i32, %arg1: i32, %arg2: memref<1x8x128xf32, #tpu.memory_space<vmem>>, %arg3: memref<1x8x1xi32, #tpu.memory_space<vmem>>, %arg4: memref<1x8x1xf32, #tpu.memory_space<vmem>>, %arg5: memref<1x8x1xf32, #tpu.memory_space<vmem>>, %arg6: memref<1x1x1xf32, #tpu.memory_space<vmem>>, %arg7: memref<1x1x1xf32, #tpu.memory_space<vmem>>, %arg8: memref<1x1x1xf32, #tpu.memory_space<vmem>>, %arg9: memref<1x1x1xf32, #tpu.memory_space<vmem>>) attributes {dimension_semantics = [#tpu.dimension_semantics<parallel>, #tpu.dimension_semantics<arbitrary>], iteration_bounds = array<i64: 2, 1>, scalar_prefetch = 0 : i64, scratch_operands = 0 : i64, tpu.core_type = #tpu.core_type<tc>, window_params = [{transform_indices = @transform_0, window_bounds = array<i64: 1, 8, 128>}, {transform_indices = @transform_1, window_bounds = array<i64: 1, 8, 1>}, {transform_indices = @transform_2, window_bounds = array<i64: 1, 8, 1>}, {transform_indices = @transform_3, window_bounds = array<i64: 1, 8, 1>}, {transform_indices = @transform_4, window_bounds = array<i64: 1, 1, 1>}, {transform_indices = @transform_5, window_bounds = array<i64: 1, 1, 1>}, {transform_indices = @transform_6, window_bounds = array<i64: 1, 1, 1>}, {transform_indices = @transform_7, window_bounds = array<i64: 1, 1, 1>}]} {
    %c0_i32 = arith.constant 0 : i32
    %0 = arith.cmpi eq, %arg1, %c0_i32 : i32
    %1 = arith.extui %0 : i1 to i32
    %c0_i32_0 = arith.constant 0 : i32
    %2 = arith.cmpi ne, %1, %c0_i32_0 : i32
    scf.if %2 {
      %cst_46 = arith.constant 0.000000e+00 : f32
      %77 = vector.broadcast %cst_46 : f32 to vector<1x1x1xf32>
      %c0_47 = arith.constant 0 : index
      %c0_48 = arith.constant 0 : index
      %c0_49 = arith.constant 0 : index
      %78 = vector.load %arg6[%c0_47, %c0_48, %c0_49] : memref<1x1x1xf32, #tpu.memory_space<vmem>>, vector<1x1x1xf32>
      tpu.vector_store %arg6[%c0_47, %c0_48, %c0_49], %77 {strides = array<i32>} : memref<1x1x1xf32, #tpu.memory_space<vmem>>, vector<1x1x1xf32>,
      %cst_50 = arith.constant 0.000000e+00 : f32
      %79 = vector.broadcast %cst_50 : f32 to vector<1x1x1xf32>
      %c0_51 = arith.constant 0 : index
      %c0_52 = arith.constant 0 : index
      %c0_53 = arith.constant 0 : index
      %80 = vector.load %arg7[%c0_51, %c0_52, %c0_53] : memref<1x1x1xf32, #tpu.memory_space<vmem>>, vector<1x1x1xf32>
      tpu.vector_store %arg7[%c0_51, %c0_52, %c0_53], %79 {strides = array<i32>} : memref<1x1x1xf32, #tpu.memory_space<vmem>>, vector<1x1x1xf32>,
      %cst_54 = arith.constant 0.000000e+00 : f32
      %81 = vector.broadcast %cst_54 : f32 to vector<1x1x1xf32>
      %c0_55 = arith.constant 0 : index
      %c0_56 = arith.constant 0 : index
      %c0_57 = arith.constant 0 : index
      %82 = vector.load %arg8[%c0_55, %c0_56, %c0_57] : memref<1x1x1xf32, #tpu.memory_space<vmem>>, vector<1x1x1xf32>
      tpu.vector_store %arg8[%c0_55, %c0_56, %c0_57], %81 {strides = array<i32>} : memref<1x1x1xf32, #tpu.memory_space<vmem>>, vector<1x1x1xf32>,
      %cst_58 = arith.constant 0.000000e+00 : f32
      %83 = vector.broadcast %cst_58 : f32 to vector<1x1x1xf32>
      %c0_59 = arith.constant 0 : index
      %c0_60 = arith.constant 0 : index
      %c0_61 = arith.constant 0 : index
      %84 = vector.load %arg9[%c0_59, %c0_60, %c0_61] : memref<1x1x1xf32, #tpu.memory_space<vmem>>, vector<1x1x1xf32>
      tpu.vector_store %arg9[%c0_59, %c0_60, %c0_61], %83 {strides = array<i32>} : memref<1x1x1xf32, #tpu.memory_space<vmem>>, vector<1x1x1xf32>,
    } else {
    }
    %c0 = arith.constant 0 : index
    %c0_1 = arith.constant 0 : index
    %c0_2 = arith.constant 0 : index
    %3 = vector.load %arg2[%c0, %c0_1, %c0_2] : memref<1x8x128xf32, #tpu.memory_space<vmem>>, vector<1x8x128xf32>
    %4 = vector.shape_cast %3 : vector<1x8x128xf32> to vector<8x128xf32>
    %c0_3 = arith.constant 0 : index
    %c0_4 = arith.constant 0 : index
    %c0_5 = arith.constant 0 : index
    %5 = vector.load %arg3[%c0_3, %c0_4, %c0_5] : memref<1x8x1xi32, #tpu.memory_space<vmem>>, vector<1x8x1xi32>
    %6 = vector.shape_cast %5 : vector<1x8x1xi32> to vector<8x1xi32>
    %c-100_i32 = arith.constant -100 : i32
    %7 = vector.broadcast %c-100_i32 : i32 to vector<8x1xi32>
    %8 = arith.cmpi ne, %6, %7 : vector<8x1xi32>
    %cst = arith.constant dense<0xFF800000> : vector<8xf32>
    %9 = vector.multi_reduction <maximumf>, %4, %cst [1] : vector<8x128xf32> to vector<8xf32>
    %10 = vector.shape_cast %9 : vector<8xf32> to vector<8x1xf32>
    %11 = vector.broadcast %10 : vector<8x1xf32> to vector<8x128xf32>
    %12 = arith.subf %4, %11 : vector<8x128xf32>
    %13 = math.exp %12 : vector<8x128xf32>
    %cst_6 = arith.constant dense<0.000000e+00> : vector<8xf32>
    %14 = vector.multi_reduction <add>, %13, %cst_6 [1] : vector<8x128xf32> to vector<8xf32>
    %15 = vector.shape_cast %14 : vector<8xf32> to vector<8x1xf32>
    %16 = tpu.iota {dimensions = array<i32: 1>} : vector<8x128xi32>
    %17 = vector.broadcast %6 : vector<8x1xi32> to vector<8x128xi32>
    %18 = arith.cmpi eq, %16, %17 : vector<8x128xi32>
    %cst_7 = arith.constant 0.000000e+00 : f32
    %19 = vector.broadcast %cst_7 : f32 to vector<8x128xf32>
    %20 = arith.select %18, %12, %19 : vector<8x128xi1>, vector<8x128xf32>
    %cst_8 = arith.constant dense<0.000000e+00> : vector<8xf32>
    %21 = vector.multi_reduction <add>, %20, %cst_8 [1] : vector<8x128xf32> to vector<8xf32>
    %22 = vector.shape_cast %21 : vector<8xf32> to vector<8x1xf32>
    %23 = math.log %15 : vector<8x1xf32>
    %24 = arith.subf %23, %22 : vector<8x1xf32>
    %cst_9 = arith.constant 0.000000e+00 : f32
    %25 = vector.broadcast %cst_9 : f32 to vector<8x1xf32>
    %26 = arith.select %8, %24, %25 : vector<8x1xi1>, vector<8x1xf32>
    %c0_10 = arith.constant 0 : index
    %c0_11 = arith.constant 0 : index
    %c0_12 = arith.constant 0 : index
    %27 = vector.load %arg6[%c0_10, %c0_11, %c0_12] : memref<1x1x1xf32, #tpu.memory_space<vmem>>, vector<1x1x1xf32>
    %28 = vector.shape_cast %26 : vector<8x1xf32> to vector<1x8x1xf32>
    %cst_13 = arith.constant dense<0.000000e+00> : vector<1xf32>
    %29 = vector.multi_reduction <add>, %28, %cst_13 [1, 2] : vector<1x8x1xf32> to vector<1xf32>
    %30 = vector.shape_cast %29 : vector<1xf32> to vector<1x1x1xf32>
    %31 = vector.extract %30[0, 0, 0] : f32 from vector<1x1x1xf32>
    %32 = vector.broadcast %31 : f32 to vector<1x1xf32>
    %33 = vector.shape_cast %32 : vector<1x1xf32> to vector<1x1x1xf32>
    %34 = arith.addf %27, %33 : vector<1x1x1xf32>
    %c0_14 = arith.constant 0 : index
    %c0_15 = arith.constant 0 : index
    %c0_16 = arith.constant 0 : index
    %35 = vector.load %arg6[%c0_14, %c0_15, %c0_16] : memref<1x1x1xf32, #tpu.memory_space<vmem>>, vector<1x1x1xf32>
    tpu.vector_store %arg6[%c0_14, %c0_15, %c0_16], %34 {strides = array<i32>} : memref<1x1x1xf32, #tpu.memory_space<vmem>>, vector<1x1x1xf32>,
    %c0_17 = arith.constant 0 : index
    %c0_18 = arith.constant 0 : index
    %c0_19 = arith.constant 0 : index
    %36 = vector.load %arg7[%c0_17, %c0_18, %c0_19] : memref<1x1x1xf32, #tpu.memory_space<vmem>>, vector<1x1x1xf32>
    %37 = arith.extui %8 : vector<8x1xi1> to vector<8x1xi32>
    %38 = arith.sitofp %37 : vector<8x1xi32> to vector<8x1xf32>
    %39 = vector.shape_cast %38 : vector<8x1xf32> to vector<1x8x1xf32>
    %cst_20 = arith.constant dense<0.000000e+00> : vector<1xf32>
    %40 = vector.multi_reduction <add>, %39, %cst_20 [1, 2] : vector<1x8x1xf32> to vector<1xf32>
    %41 = vector.shape_cast %40 : vector<1xf32> to vector<1x1x1xf32>
    %42 = vector.extract %41[0, 0, 0] : f32 from vector<1x1x1xf32>
    %43 = vector.broadcast %42 : f32 to vector<1x1xf32>
    %44 = vector.shape_cast %43 : vector<1x1xf32> to vector<1x1x1xf32>
    %45 = arith.addf %36, %44 : vector<1x1x1xf32>
    %c0_21 = arith.constant 0 : index
    %c0_22 = arith.constant 0 : index
    %c0_23 = arith.constant 0 : index
    %46 = vector.load %arg7[%c0_21, %c0_22, %c0_23] : memref<1x1x1xf32, #tpu.memory_space<vmem>>, vector<1x1x1xf32>
    tpu.vector_store %arg7[%c0_21, %c0_22, %c0_23], %45 {strides = array<i32>} : memref<1x1x1xf32, #tpu.memory_space<vmem>>, vector<1x1x1xf32>,
    %c0_24 = arith.constant 0 : index
    %c0_25 = arith.constant 0 : index
    %c0_26 = arith.constant 0 : index
    %47 = vector.load %arg4[%c0_24, %c0_25, %c0_26] : memref<1x8x1xf32, #tpu.memory_space<vmem>>, vector<1x8x1xf32>
    %48 = vector.shape_cast %47 : vector<1x8x1xf32> to vector<8x1xf32>
    %c0_27 = arith.constant 0 : index
    %c0_28 = arith.constant 0 : index
    %c0_29 = arith.constant 0 : index
    %49 = vector.load %arg5[%c0_27, %c0_28, %c0_29] : memref<1x8x1xf32, #tpu.memory_space<vmem>>, vector<1x8x1xf32>
    %50 = vector.shape_cast %49 : vector<1x8x1xf32> to vector<8x1xf32>
    %cst_30 = arith.constant -1.000000e+02 : f32
    %51 = vector.broadcast %cst_30 : f32 to vector<8x1xf32>
    %52 = arith.cmpf one, %50, %51 : vector<8x1xf32>
    %53 = arith.subf %48, %50 : vector<8x1xf32>
    %54 = math.absf %53 : vector<8x1xf32>
    %cst_31 = arith.constant 0.000000e+00 : f32
    %55 = vector.broadcast %cst_31 : f32 to vector<8x1xf32>
    %56 = arith.select %52, %54, %55 : vector<8x1xi1>, vector<8x1xf32>
    %c0_32 = arith.constant 0 : index
    %c0_33 = arith.constant 0 : index
    %c0_34 = arith.constant 0 : index
    %57 = vector.load %arg8[%c0_32, %c0_33, %c0_34] : memref<1x1x1xf32, #tpu.memory_space<vmem>>, vector<1x1x1xf32>
    %58 = vector.shape_cast %56 : vector<8x1xf32> to vector<1x8x1xf32>
    %cst_35 = arith.constant dense<0.000000e+00> : vector<1xf32>
    %59 = vector.multi_reduction <add>, %58, %cst_35 [1, 2] : vector<1x8x1xf32> to vector<1xf32>
    %60 = vector.shape_cast %59 : vector<1xf32> to vector<1x1x1xf32>
    %61 = vector.extract %60[0, 0, 0] : f32 from vector<1x1x1xf32>
    %62 = vector.broadcast %61 : f32 to vector<1x1xf32>
    %63 = vector.shape_cast %62 : vector<1x1xf32> to vector<1x1x1xf32>
    %64 = arith.addf %57, %63 : vector<1x1x1xf32>
    %c0_36 = arith.constant 0 : index
    %c0_37 = arith.constant 0 : index
    %c0_38 = arith.constant 0 : index
    %65 = vector.load %arg8[%c0_36, %c0_37, %c0_38] : memref<1x1x1xf32, #tpu.memory_space<vmem>>, vector<1x1x1xf32>
    tpu.vector_store %arg8[%c0_36, %c0_37, %c0_38], %64 {strides = array<i32>} : memref<1x1x1xf32, #tpu.memory_space<vmem>>, vector<1x1x1xf32>,
    %c0_39 = arith.constant 0 : index
    %c0_40 = arith.constant 0 : index
    %c0_41 = arith.constant 0 : index
    %66 = vector.load %arg9[%c0_39, %c0_40, %c0_41] : memref<1x1x1xf32, #tpu.memory_space<vmem>>, vector<1x1x1xf32>
    %67 = arith.extui %52 : vector<8x1xi1> to vector<8x1xi32>
    %68 = arith.sitofp %67 : vector<8x1xi32> to vector<8x1xf32>
    %69 = vector.shape_cast %68 : vector<8x1xf32> to vector<1x8x1xf32>
    %cst_42 = arith.constant dense<0.000000e+00> : vector<1xf32>
    %70 = vector.multi_reduction <add>, %69, %cst_42 [1, 2] : vector<1x8x1xf32> to vector<1xf32>
    %71 = vector.shape_cast %70 : vector<1xf32> to vector<1x1x1xf32>
    %72 = vector.extract %71[0, 0, 0] : f32 from vector<1x1x1xf32>
    %73 = vector.broadcast %72 : f32 to vector<1x1xf32>
    %74 = vector.shape_cast %73 : vector<1x1xf32> to vector<1x1x1xf32>
    %75 = arith.addf %66, %74 : vector<1x1x1xf32>
    %c0_43 = arith.constant 0 : index
    %c0_44 = arith.constant 0 : index
    %c0_45 = arith.constant 0 : index
    %76 = vector.load %arg9[%c0_43, %c0_44, %c0_45] : memref<1x1x1xf32, #tpu.memory_space<vmem>>, vector<1x1x1xf32>
    tpu.vector_store %arg9[%c0_43, %c0_44, %c0_45], %75 {strides = array<i32>} : memref<1x1x1xf32, #tpu.memory_space<vmem>>, vector<1x1x1xf32>,
    return
  }
  func.func @transform_0(%arg0: i32, %arg1: i32) -> (i32, i32, i32) {
    %c0_i32 = arith.constant 0 : i32
    %c0_i32_0 = arith.constant 0 : i32
    return %arg0, %arg1, %c0_i32 : i32, i32, i32
  }
  func.func @transform_1(%arg0: i32, %arg1: i32) -> (i32, i32, i32) {
    %c0_i32 = arith.constant 0 : i32
    %c0_i32_0 = arith.constant 0 : i32
    return %arg0, %arg1, %c0_i32 : i32, i32, i32
  }
  func.func @transform_2(%arg0: i32, %arg1: i32) -> (i32, i32, i32) {
    %c0_i32 = arith.constant 0 : i32
    %c0_i32_0 = arith.constant 0 : i32
    return %arg0, %arg1, %c0_i32 : i32, i32, i32
  }
  func.func @transform_3(%arg0: i32, %arg1: i32) -> (i32, i32, i32) {
    %c0_i32 = arith.constant 0 : i32
    %c0_i32_0 = arith.constant 0 : i32
    return %arg0, %arg1, %c0_i32 : i32, i32, i32
  }
  func.func @transform_4(%arg0: i32, %arg1: i32) -> (i32, i32, i32) {
    %c0_i32 = arith.constant 0 : i32
    %c0_i32_0 = arith.constant 0 : i32
    %c0_i32_1 = arith.constant 0 : i32
    return %arg0, %c0_i32, %c0_i32_0 : i32, i32, i32
  }
  func.func @transform_5(%arg0: i32, %arg1: i32) -> (i32, i32, i32) {
    %c0_i32 = arith.constant 0 : i32
    %c0_i32_0 = arith.constant 0 : i32
    %c0_i32_1 = arith.constant 0 : i32
    return %arg0, %c0_i32, %c0_i32_0 : i32, i32, i32
  }
  func.func @transform_6(%arg0: i32, %arg1: i32) -> (i32, i32, i32) {
    %c0_i32 = arith.constant 0 : i32
    %c0_i32_0 = arith.constant 0 : i32
    %c0_i32_1 = arith.constant 0 : i32
    return %arg0, %c0_i32, %c0_i32_0 : i32, i32, i32
  }
  func.func @transform_7(%arg0: i32, %arg1: i32) -> (i32, i32, i32) {
    %c0_i32 = arith.constant 0 : i32
    %c0_i32_0 = arith.constant 0 : i32
    %c0_i32_1 = arith.constant 0 : i32
    return %arg0, %c0_i32, %c0_i32_0 : i32, i32, i32
  }
}

</mosaic_0001>

<llo_original>
// kernel: copilot_criterions_num_forward.1
$region0: #{copilot_criterions_num_forward.1}
  #allocation0 [shape = 'u32[]', space=smem, size = 0x4, offset = 0x4, fixed_abs, tag = 'smem constant byte address 0x4 - core index']
  #allocation1 [shape = 'u32[144,128]{1,0:T(1,128)}', space=vmem, size = 0x12000, scoped, tag = 'internal scratch']
  %s0 = inlined_call_operand.vmem [shape: f32[2,8,128], index: 0, kind: input, shape index: {}]
  %s1 = inlined_call_operand.vmem [shape: s32[2,8,1], index: 1, kind: input, shape index: {}]
  %s2 = inlined_call_operand.vmem [shape: f32[2,8,1], index: 2, kind: input, shape index: {}]
  %s3 = inlined_call_operand.vmem [shape: f32[2,8,1], index: 3, kind: input, shape index: {}]
  %s4 = inlined_call_operand.vmem [shape: f32[2,1,1], index: 4, kind: output, shape index: {0}]
  %s5 = inlined_call_operand.vmem [shape: f32[2,1,1], index: 5, kind: output, shape index: {1}]
  %s6 = inlined_call_operand.vmem [shape: f32[2,1,1], index: 6, kind: output, shape index: {2}]
  %s7 = inlined_call_operand.vmem [shape: f32[2,1,1], index: 7, kind: output, shape index: {3}]
  %8 = xla_tuple %s4, %s5, %s6, %s7
  %s9 = sld [smem:[#allocation0]]
  $region77: #{copilot_criterions_num_forward.1} parent=0
    _
  %s11 = ssub.s32 1, %s9
  %s12 = scalar_select 0, %s11, %s9
  loop: start=0, step=1, limit=4
  $region2: #{copilot_criterions_num_forward.1} parent=0 // loop_pre_header
    _
  $region3: #{copilot_criterions_num_forward.1} parent=0 // loop_header
    %s14 = sphi 0, %s18
    %p15 = scmp.ge.s32.totalorder %s14, 4
    %s21 = sphi 0, %s33
    %s22 = sphi 0, %s29
    %s23 = sphi 0, %s21
    %s24 = sphi 0, %s22
    %s25 = sphi 0, %s23
    %s26 = sphi 0, %s24
    %s38 = sphi 0, %s40
    %s41 = sphi 0, %s38
    %s42 = sphi 0, %s41
    %s58 = sphi 0, %s42
    %s66 = sphi 0, %s68
    %s69 = sphi 0, %s66
    %s70 = sphi 0, %s69
    %s86 = sphi 0, %s70
    %s94 = sphi 0, %s96
    %s97 = sphi 0, %s94
    %s98 = sphi 0, %s97
    %s114 = sphi 0, %s98
    %s122 = sphi 0, %s124
    %s125 = sphi 0, %s122
    %s126 = sphi 0, %s125
    %s142 = sphi 0, %s126
    %s148 = sphi 0, %s150
    %s151 = sphi 0, %s148
    %s152 = sphi 0, %s151
    %s168 = sphi 0, %s152
    %s174 = sphi 0, %s176
    %s177 = sphi 0, %s174
    %s178 = sphi 0, %s177
    %s194 = sphi 0, %s178
    %s200 = sphi 0, %s202
    %s203 = sphi 0, %s200
    %s204 = sphi 0, %s203
    %s220 = sphi 0, %s204
    %s226 = sphi 0, %s228
    %s229 = sphi 0, %s226
    %s230 = sphi 0, %s229
    %s246 = sphi 0, %s230
  $region4: #{copilot_criterions_num_forward.1} parent=0 // loop_header_branch
    %17 = sbr.rel (%p15) target = $region8
  $region5: #{copilot_criterions_num_forward.1} parent=0 // loop_body
    %s19 = ssub.s32 %s14, 1
    %s20 = ssub.s32 %s14, 2
    %s27 = sadd.s32 1, %s22
    %p28 = scmp.ge.s32.totalorder %s27, 1
    %s29 = scalar_select %p28, 0, %s27
    %s30 = sadd.s32 1, %s21
    %s31 = scalar_select %p28, %s30, %s21
    %p32 = scmp.ge.s32.totalorder %s31, 2
    %s33 = scalar_select %p32, 0, %s31
    %s34 = ssub.s32 %s21, %s33
    %s35 = ssub.s32 %s22, %s29
    %s36 = sor.u32 %s34, %s35
    %p37 = scmp.eq.s32.totalorder %s36, 0
    %s39 = sadd.s32 %s38, 1
    %s40 = scalar_select %p37, %s38, %s39
    %p43 = pneg %p37
    %p44 = scmp.eq.s32.totalorder %s14, 1
    %p45 = por %p43, %p44
    %p46 = scmp.ne.s32.totalorder %s38, %s41
    %p47 = scmp.eq.s32.totalorder %s14, 0
    %p48 = por %p46, %p47
    %p49 = scmp.ne.s32.totalorder %s38, %s41
    %p50 = scmp.eq.s32.totalorder %s19, 1
    %p51 = por %p49, %p50
    %p52 = scmp.ne.s32.totalorder %s41, %s42
    %p53 = scmp.eq.s32.totalorder %s19, 0
    %p54 = por %p52, %p53
    %p55 = scmp.ne.s32.totalorder %s41, %s42
    %p56 = scmp.eq.s32.totalorder %s20, 1
    %p57 = por %p55, %p56
    %p59 = scmp.ne.s32.totalorder %s42, %s58
    %p60 = scmp.eq.s32.totalorder %s20, 0
    %p61 = por %p59, %p60
    %s62 = ssub.s32 %s21, %s33
    %s63 = ssub.s32 %s22, %s29
    %s64 = sor.u32 %s62, %s63
    %p65 = scmp.eq.s32.totalorder %s64, 0
    %s67 = sadd.s32 %s66, 1
    %s68 = scalar_select %p65, %s66, %s67
    %p71 = pneg %p65
    %p72 = scmp.eq.s32.totalorder %s14, 1
    %p73 = por %p71, %p72
    %p74 = scmp.ne.s32.totalorder %s66, %s69
    %p75 = scmp.eq.s32.totalorder %s14, 0
    %p76 = por %p74, %p75
    %p77 = scmp.ne.s32.totalorder %s66, %s69
    %p78 = scmp.eq.s32.totalorder %s19, 1
    %p79 = por %p77, %p78
    %p80 = scmp.ne.s32.totalorder %s69, %s70
    %p81 = scmp.eq.s32.totalorder %s19, 0
    %p82 = por %p80, %p81
    %p83 = scmp.ne.s32.totalorder %s69, %s70
    %p84 = scmp.eq.s32.totalorder %s20, 1
    %p85 = por %p83, %p84
    %p87 = scmp.ne.s32.totalorder %s70, %s86
    %p88 = scmp.eq.s32.totalorder %s20, 0
    %p89 = por %p87, %p88
    %s90 = ssub.s32 %s21, %s33
    %s91 = ssub.s32 %s22, %s29
    %s92 = sor.u32 %s90, %s91
    %p93 = scmp.eq.s32.totalorder %s92, 0
    %s95 = sadd.s32 %s94, 1
    %s96 = scalar_select %p93, %s94, %s95
    %p99 = pneg %p93
    %p100 = scmp.eq.s32.totalorder %s14, 1
    %p101 = por %p99, %p100
    %p102 = scmp.ne.s32.totalorder %s94, %s97
    %p103 = scmp.eq.s32.totalorder %s14, 0
    %p104 = por %p102, %p103
    %p105 = scmp.ne.s32.totalorder %s94, %s97
    %p106 = scmp.eq.s32.totalorder %s19, 1
    %p107 = por %p105, %p106
    %p108 = scmp.ne.s32.totalorder %s97, %s98
    %p109 = scmp.eq.s32.totalorder %s19, 0
    %p110 = por %p108, %p109
    %p111 = scmp.ne.s32.totalorder %s97, %s98
    %p112 = scmp.eq.s32.totalorder %s20, 1
    %p113 = por %p111, %p112
    %p115 = scmp.ne.s32.totalorder %s98, %s114
    %p116 = scmp.eq.s32.totalorder %s20, 0
    %p117 = por %p115, %p116
    %s118 = ssub.s32 %s21, %s33
    %s119 = ssub.s32 %s22, %s29
    %s120 = sor.u32 %s118, %s119
    %p121 = scmp.eq.s32.totalorder %s120, 0
    %s123 = sadd.s32 %s122, 1
    %s124 = scalar_select %p121, %s122, %s123
    %p127 = pneg %p121
    %p128 = scmp.eq.s32.totalorder %s14, 1
    %p129 = por %p127, %p128
    %p130 = scmp.ne.s32.totalorder %s122, %s125
    %p131 = scmp.eq.s32.totalorder %s14, 0
    %p132 = por %p130, %p131
    %p133 = scmp.ne.s32.totalorder %s122, %s125
    %p134 = scmp.eq.s32.totalorder %s19, 1
    %p135 = por %p133, %p134
    %p136 = scmp.ne.s32.totalorder %s125, %s126
    %p137 = scmp.eq.s32.totalorder %s19, 0
    %p138 = por %p136, %p137
    %p139 = scmp.ne.s32.totalorder %s125, %s126
    %p140 = scmp.eq.s32.totalorder %s20, 1
    %p141 = por %p139, %p140
    %p143 = scmp.ne.s32.totalorder %s126, %s142
    %p144 = scmp.eq.s32.totalorder %s20, 0
    %p145 = por %p143, %p144
    %s146 = ssub.s32 %s21, %s33
    %p147 = scmp.eq.s32.totalorder %s146, 0
    %s149 = sadd.s32 %s148, 1
    %s150 = scalar_select %p147, %s148, %s149
    %p153 = pneg %p147
    %p154 = scmp.eq.s32.totalorder %s14, 1
    %p155 = por %p153, %p154
    %p156 = scmp.ne.s32.totalorder %s148, %s151
    %p157 = scmp.eq.s32.totalorder %s14, 0
    %p158 = por %p156, %p157
    %p159 = scmp.ne.s32.totalorder %s148, %s151
    %p160 = scmp.eq.s32.totalorder %s19, 1
    %p161 = por %p159, %p160
    %p162 = scmp.ne.s32.totalorder %s151, %s152
    %p163 = scmp.eq.s32.totalorder %s19, 0
    %p164 = por %p162, %p163
    %p165 = scmp.ne.s32.totalorder %s151, %s152
    %p166 = scmp.eq.s32.totalorder %s20, 1
    %p167 = por %p165, %p166
    %p169 = scmp.ne.s32.totalorder %s152, %s168
    %p170 = scmp.eq.s32.totalorder %s20, 0
    %p171 = por %p169, %p170
    %s172 = ssub.s32 %s21, %s33
    %p173 = scmp.eq.s32.totalorder %s172, 0
    %s175 = sadd.s32 %s174, 1
    %s176 = scalar_select %p173, %s174, %s175
    %p179 = pneg %p173
    %p180 = scmp.eq.s32.totalorder %s14, 1
    %p181 = por %p179, %p180
    %p182 = scmp.ne.s32.totalorder %s174, %s177
    %p183 = scmp.eq.s32.totalorder %s14, 0
    %p184 = por %p182, %p183
    %p185 = scmp.ne.s32.totalorder %s174, %s177
    %p186 = scmp.eq.s32.totalorder %s19, 1
    %p187 = por %p185, %p186
    %p188 = scmp.ne.s32.totalorder %s177, %s178
    %p189 = scmp.eq.s32.totalorder %s19, 0
    %p190 = por %p188, %p189
    %p191 = scmp.ne.s32.totalorder %s177, %s178
    %p192 = scmp.eq.s32.totalorder %s20, 1
    %p193 = por %p191, %p192
    %p195 = scmp.ne.s32.totalorder %s178, %s194
    %p196 = scmp.eq.s32.totalorder %s20, 0
    %p197 = por %p195, %p196
    %s198 = ssub.s32 %s21, %s33
    %p199 = scmp.eq.s32.totalorder %s198, 0
    %s201 = sadd.s32 %s200, 1
    %s202 = scalar_select %p199, %s200, %s201
    %p205 = pneg %p199
    %p206 = scmp.eq.s32.totalorder %s14, 1
    %p207 = por %p205, %p206
    %p208 = scmp.ne.s32.totalorder %s200, %s203
    %p209 = scmp.eq.s32.totalorder %s14, 0
    %p210 = por %p208, %p209
    %p211 = scmp.ne.s32.totalorder %s200, %s203
    %p212 = scmp.eq.s32.totalorder %s19, 1
    %p213 = por %p211, %p212
    %p214 = scmp.ne.s32.totalorder %s203, %s204
    %p215 = scmp.eq.s32.totalorder %s19, 0
    %p216 = por %p214, %p215
    %p217 = scmp.ne.s32.totalorder %s203, %s204
    %p218 = scmp.eq.s32.totalorder %s20, 1
    %p219 = por %p217, %p218
    %p221 = scmp.ne.s32.totalorder %s204, %s220
    %p222 = scmp.eq.s32.totalorder %s20, 0
    %p223 = por %p221, %p222
    %s224 = ssub.s32 %s21, %s33
    %p225 = scmp.eq.s32.totalorder %s224, 0
    %s227 = sadd.s32 %s226, 1
    %s228 = scalar_select %p225, %s226, %s227
    %p231 = pneg %p225
    %p232 = scmp.eq.s32.totalorder %s14, 1
    %p233 = por %p231, %p232
    %p234 = scmp.ne.s32.totalorder %s226, %s229
    %p235 = scmp.eq.s32.totalorder %s14, 0
    %p236 = por %p234, %p235
    %p237 = scmp.ne.s32.totalorder %s226, %s229
    %p238 = scmp.eq.s32.totalorder %s19, 1
    %p239 = por %p237, %p238
    %p240 = scmp.ne.s32.totalorder %s229, %s230
    %p241 = scmp.eq.s32.totalorder %s19, 0
    %p242 = por %p240, %p241
    %p243 = scmp.ne.s32.totalorder %s229, %s230
    %p244 = scmp.eq.s32.totalorder %s20, 1
    %p245 = por %p243, %p244
    %p247 = scmp.ne.s32.totalorder %s230, %s246
    %p248 = scmp.eq.s32.totalorder %s20, 0
    %p249 = por %p247, %p248
    %p250 = scmp.le.s32.totalorder 1, %s14
    %p251 = scmp.lt.s32.totalorder %s14, 3
    %p252 = pnand %p250, %p251
    %p253 = pneg %p252
    // Predicated region
    $region9: #{copilot_criterions_num_forward.1} parent=5 // pred_check
      _
    $region10: #{copilot_criterions_num_forward.1} parent=5 // pred_check_branch
      %255 = sbr.rel (%p252) target = $region12
    $region11: #{copilot_criterions_num_forward.1} parent=5 // pred_region
      %s256 = ssub.s32 %s14, 1
    $region12: #{copilot_criterions_num_forward.1} parent=5 // pred_fallthru
      _
    %p257 = scmp.lt.s32.totalorder %s14, 2
    // Predicated region
    $region13: #{copilot_criterions_num_forward.1} parent=5 // pred_check
      %p258 = pneg %p257
    $region14: #{copilot_criterions_num_forward.1} parent=5 // pred_check_branch
      %260 = sbr.rel (%p258) target = $region16
    $region15: #{copilot_criterions_num_forward.1} parent=5 // pred_region
      // Predicated region
      $region17: #{copilot_criterions_num_forward.1} parent=15 // pred_check
        %p261 = pneg %p48
      $region18: #{copilot_criterions_num_forward.1} parent=15 // pred_check_branch
        %263 = sbr.rel (%p261) target = $region20
      $region19: #{copilot_criterions_num_forward.1} parent=15 // pred_region
        %p264 = scmp.lt.s32.totalorder %s21, 1
        %s265 = scalar_select %p264, %s21, 1
        %p266 = scmp.lt.s32.totalorder %s22, 0
        %s267 = scalar_select %p266, %s22, 0
        %s268 = sadd.s32 %s267, %s265
        %s269 = smul.addr %s268, 8
        %s270 = scalar_lea.vmem %s0, %s269
      $region20: #{copilot_criterions_num_forward.1} parent=15 // pred_fallthru
        _
      // Predicated region
      $region21: #{copilot_criterions_num_forward.1} parent=15 // pred_check
        %p271 = pneg %p76
      $region22: #{copilot_criterions_num_forward.1} parent=15 // pred_check_branch
        %273 = sbr.rel (%p271) target = $region24
      $region23: #{copilot_criterions_num_forward.1} parent=15 // pred_region
        %p274 = scmp.lt.s32.totalorder %s21, 1
        %s275 = scalar_select %p274, %s21, 1
        %p276 = scmp.lt.s32.totalorder %s22, 0
        %s277 = scalar_select %p276, %s22, 0
        %s278 = sadd.s32 %s277, %s275
        %s279 = smul.addr %s278, 8
        %s280 = scalar_lea.vmem %s1, %s279
      $region24: #{copilot_criterions_num_forward.1} parent=15 // pred_fallthru
        _
      // Predicated region
      $region25: #{copilot_criterions_num_forward.1} parent=15 // pred_check
        %p281 = pneg %p104
      $region26: #{copilot_criterions_num_forward.1} parent=15 // pred_check_branch
        %283 = sbr.rel (%p281) target = $region28
      $region27: #{copilot_criterions_num_forward.1} parent=15 // pred_region
        %p284 = scmp.lt.s32.totalorder %s21, 1
        %s285 = scalar_select %p284, %s21, 1
        %p286 = scmp.lt.s32.totalorder %s22, 0
        %s287 = scalar_select %p286, %s22, 0
        %s288 = sadd.s32 %s287, %s285
        %s289 = smul.addr %s288, 8
        %s290 = scalar_lea.vmem %s2, %s289
      $region28: #{copilot_criterions_num_forward.1} parent=15 // pred_fallthru
        _
      // Predicated region
      $region29: #{copilot_criterions_num_forward.1} parent=15 // pred_check
        %p291 = pneg %p132
      $region30: #{copilot_criterions_num_forward.1} parent=15 // pred_check_branch
        %293 = sbr.rel (%p291) target = $region32
      $region31: #{copilot_criterions_num_forward.1} parent=15 // pred_region
        %p294 = scmp.lt.s32.totalorder %s21, 1
        %s295 = scalar_select %p294, %s21, 1
        %p296 = scmp.lt.s32.totalorder %s22, 0
        %s297 = scalar_select %p296, %s22, 0
        %s298 = sadd.s32 %s297, %s295
        %s299 = smul.addr %s298, 8
        %s300 = scalar_lea.vmem %s3, %s299
      $region32: #{copilot_criterions_num_forward.1} parent=15 // pred_fallthru
        _
    $region16: #{copilot_criterions_num_forward.1} parent=5 // pred_fallthru
      _
    %p301 = scmp.le.s32.totalorder 1, %s14
    %p302 = scmp.lt.s32.totalorder %s14, 3
    %p303 = pnand %p301, %p302
    %p304 = pneg %p303
    // Predicated region
    $region33: #{copilot_criterions_num_forward.1} parent=5 // pred_check
      _
    $region34: #{copilot_criterions_num_forward.1} parent=5 // pred_check_branch
      %306 = sbr.rel (%p303) target = $region36
    $region35: #{copilot_criterions_num_forward.1} parent=5 // pred_region
      %s307 = ssub.s32 %s14, 1
      %p308 = scmp.lt.s32.totalorder %s23, 1
      %s309 = scalar_select %p308, %s23, 1
      %p310 = scmp.lt.s32.totalorder %s24, 0
      %s311 = scalar_select %p310, %s24, 0
      %s312 = sadd.s32 %s311, %s309
      %s313 = smul.addr %s312, 8
      %s314 = scalar_lea.vmem %s0, %s313
      %p315 = pneg %p54
      %p316 = pneg %p51
      %p317 = scmp.lt.s32.totalorder %s23, 1
      %s318 = scalar_select %p317, %s23, 1
      %p319 = scmp.lt.s32.totalorder %s24, 0
      %s320 = scalar_select %p319, %s24, 0
      %s321 = sadd.s32 %s320, %s318
      %s322 = smul.addr %s321, 8
      %s323 = scalar_lea.vmem %s1, %s322
      %p324 = pneg %p82
      %p325 = pneg %p79
      %p326 = scmp.lt.s32.totalorder %s23, 1
      %s327 = scalar_select %p326, %s23, 1
      %p328 = scmp.lt.s32.totalorder %s24, 0
      %s329 = scalar_select %p328, %s24, 0
      %s330 = sadd.s32 %s329, %s327
      %s331 = smul.addr %s330, 8
      %s332 = scalar_lea.vmem %s2, %s331
      %p333 = pneg %p110
      %p334 = pneg %p107
      %p335 = scmp.lt.s32.totalorder %s23, 1
      %s336 = scalar_select %p335, %s23, 1
      %p337 = scmp.lt.s32.totalorder %s24, 0
      %s338 = scalar_select %p337, %s24, 0
      %s339 = sadd.s32 %s338, %s336
      %s340 = smul.addr %s339, 8
      %s341 = scalar_lea.vmem %s3, %s340
      %p342 = pneg %p138
      %p343 = pneg %p135
      %p344 = pneg %p164
      %p345 = pneg %p161
      %p346 = scmp.lt.s32.totalorder %s23, 1
      %s347 = scalar_select %p346, %s23, 1
      %s348 = scalar_lea.vmem %s4, %s347
      %p349 = pneg %p190
      %p350 = pneg %p187
      %p351 = scmp.lt.s32.totalorder %s23, 1
      %s352 = scalar_select %p351, %s23, 1
      %s353 = scalar_lea.vmem %s5, %s352
      %p354 = pneg %p216
      %p355 = pneg %p213
      %p356 = scmp.lt.s32.totalorder %s23, 1
      %s357 = scalar_select %p356, %s23, 1
      %s358 = scalar_lea.vmem %s6, %s357
      %p359 = pneg %p242
      %p360 = pneg %p239
      %p361 = scmp.lt.s32.totalorder %s23, 1
      %s362 = scalar_select %p361, %s23, 1
      %s363 = scalar_lea.vmem %s7, %s362
      %p364 = scmp.lt.s32.totalorder %s23, 1
      %s365 = scalar_select %p364, %s23, 1
      %p366 = scmp.lt.s32.totalorder %s24, 0
      %s367 = scalar_select %p366, %s24, 0
      %s368 = sadd.s32 %s367, %s365
      %s369 = smul.addr %s368, 8
      %s370 = scalar_lea.vmem %s0, %s369
      %p371 = scmp.lt.s32.totalorder %s23, 1
      %s372 = scalar_select %p371, %s23, 1
      %p373 = scmp.lt.s32.totalorder %s24, 0
      %s374 = scalar_select %p373, %s24, 0
      %s375 = sadd.s32 %s374, %s372
      %s376 = smul.addr %s375, 8
      %s377 = scalar_lea.vmem %s1, %s376
      %p378 = scmp.lt.s32.totalorder %s23, 1
      %s379 = scalar_select %p378, %s23, 1
      %p380 = scmp.lt.s32.totalorder %s24, 0
      %s381 = scalar_select %p380, %s24, 0
      %s382 = sadd.s32 %s381, %s379
      %s383 = smul.addr %s382, 8
      %s384 = scalar_lea.vmem %s2, %s383
      %p385 = scmp.lt.s32.totalorder %s23, 1
      %s386 = scalar_select %p385, %s23, 1
      %p387 = scmp.lt.s32.totalorder %s24, 0
      %s388 = scalar_select %p387, %s24, 0
      %s389 = sadd.s32 %s388, %s386
      %s390 = smul.addr %s389, 8
      %s391 = scalar_lea.vmem %s3, %s390
      %p392 = scmp.lt.s32.totalorder %s23, 1
      %s393 = scalar_select %p392, %s23, 1
      %s394 = scalar_lea.vmem %s4, %s393
      %p395 = scmp.lt.s32.totalorder %s23, 1
      %s396 = scalar_select %p395, %s23, 1
      %s397 = scalar_lea.vmem %s5, %s396
      %p398 = scmp.lt.s32.totalorder %s23, 1
      %s399 = scalar_select %p398, %s23, 1
      %s400 = scalar_lea.vmem %s6, %s399
      %p401 = scmp.lt.s32.totalorder %s23, 1
      %s402 = scalar_select %p401, %s23, 1
      %s403 = scalar_lea.vmem %s7, %s402
      %p404 = scmp.eq.s32.totalorder %s24, 0
      // Predicated region
      $region37: #{copilot_criterions_num_forward.1} parent=35 // pred_check
        %p405 = pneg %p404
      $region38: #{copilot_criterions_num_forward.1} parent=35 // pred_check_branch
        %407 = sbr.rel (%p405) target = $region40
      $region39: #{copilot_criterions_num_forward.1} parent=35 // pred_region
        %vm408 = vcmask 0
        %409 = vst.msk [vmem:[%s394] sm:$0x1] %vm408, 0.0
        %410 = vst.msk [vmem:[%s397] sm:$0x1] %vm408, 0.0
        %411 = vst.msk [vmem:[%s400] sm:$0x1] %vm408, 0.0
        %412 = vst.msk [vmem:[%s403] sm:$0x1] %vm408, 0.0
      $region40: #{copilot_criterions_num_forward.1} parent=35 // pred_fallthru
        _
      %v413 = vld [vmem:[%s370] sm:$0xff]
      %v414 = vld [vmem:[%s377] sm:$0xff]
      %vm415 = vcmp.ne.s32.totalorder %v414, 4294967196
      %416 = vmax.xlane.f32.xlu0 %v413
      %v417 = vpop.xlane.xlu0 %416
      %v418 = vsub.f32 %v413, %v417
      %v419 = vmul.f32 %v418, 1.442695
      %v420 = vpow.pop %v419
      %421 = vadd.xlane.f32.xlu0 %v420
      %v422 = vpop.xlane.xlu0 %421
      %v423 = vlaneseq
      %v424 = vand.u32 %v423, 127
      %425 = vset.pattern.permute.xlu0 0
      %426 = vperm.xlu0 %425, %v414
      %v427 = vpop.permute.xlu0 %426
      %vm428 = vcmp.eq.s32.totalorder %v424, %v427
      %v429 = vsel %vm428, %v418, 0.0
      %430 = vadd.xlane.f32.xlu0 %v429
      %v431 = vpop.xlane.xlu0 %430
      %v432 = vlog2.pop %v422
      %v433 = vmul.f32 %v432, 0.6931472
      %v434 = vsub.f32 %v433, %v431
      %v435 = vsel %vm415, %v434, 0.0
      %v436 = vld [vmem:[%s394] sm:$0x1]
      %vm437 = vcmask 7168
      %v438 = vsel %vm437, %v435, 0.0
      %439 = vadd.xlane.f32.xlu0 %v438
      %v440 = vpop.xlane.xlu0 %439
      %v441 = vrot.slane %v440, 4
      %v442 = vadd.f32 %v440, %v441
      %v443 = vrot.slane %v442, 2
      %v444 = vadd.f32 %v442, %v443
      %v445 = vrot.slane %v444, 1
      %v446 = vadd.f32 %v444, %v445
      %s447 = vtos %v446
      %v448 = vstv %s447
      %v449 = vadd.f32 %v436, %v448
      %vm450 = vcmask 0
      %451 = vst.msk [vmem:[%s394] sm:$0x1] %vm450, %v449
      %v452 = vld [vmem:[%s397] sm:$0x1]
      %v453 = vsel %vm415, 1, 0
      %v454 = vcvt.s32.f32 %v453
      %v455 = vsel %vm437, %v454, 0.0
      %456 = vadd.xlane.f32.xlu0 %v455
      %v457 = vpop.xlane.xlu0 %456
      %v458 = vrot.slane %v457, 4
      %v459 = vadd.f32 %v457, %v458
      %v460 = vrot.slane %v459, 2
      %v461 = vadd.f32 %v459, %v460
      %v462 = vrot.slane %v461, 1
      %v463 = vadd.f32 %v461, %v462
      %s464 = vtos %v463
      %v465 = vstv %s464
      %v466 = vadd.f32 %v452, %v465
      %467 = vst.msk [vmem:[%s397] sm:$0x1] %vm450, %v466
      %v468 = vld [vmem:[%s384] sm:$0xff]
      %v469 = vld [vmem:[%s391] sm:$0xff]
      %vm470 = vcmp.ne.f32.partialorder %v469, -100.0
      %v471 = vsub.f32 %v468, %v469
      %v472 = vand.u32 2147483647, %v471
      %v473 = vsel %vm470, %v472, 0.0
      %v474 = vld [vmem:[%s400] sm:$0x1]
      %v475 = vsel %vm437, %v473, 0.0
      %476 = vadd.xlane.f32.xlu0 %v475
      %v477 = vpop.xlane.xlu0 %476
      %v478 = vrot.slane %v477, 4
      %v479 = vadd.f32 %v477, %v478
      %v480 = vrot.slane %v479, 2
      %v481 = vadd.f32 %v479, %v480
      %v482 = vrot.slane %v481, 1
      %v483 = vadd.f32 %v481, %v482
      %s484 = vtos %v483
      %v485 = vstv %s484
      %v486 = vadd.f32 %v474, %v485
      %487 = vst.msk [vmem:[%s400] sm:$0x1] %vm450, %v486
      %v488 = vld [vmem:[%s403] sm:$0x1]
      %v489 = vsel %vm470, 1, 0
      %v490 = vcvt.s32.f32 %v489
      %v491 = vsel %vm437, %v490, 0.0
      %492 = vadd.xlane.f32.xlu0 %v491
      %v493 = vpop.xlane.xlu0 %492
      %v494 = vrot.slane %v493, 4
      %v495 = vadd.f32 %v493, %v494
      %v496 = vrot.slane %v495, 2
      %v497 = vadd.f32 %v495, %v496
      %v498 = vrot.slane %v497, 1
      %v499 = vadd.f32 %v497, %v498
      %s500 = vtos %v499
      %v501 = vstv %s500
      %v502 = vadd.f32 %v488, %v501
      %503 = vst.msk [vmem:[%s403] sm:$0x1] %vm450, %v502
      %p504 = scmp.lt.s32.totalorder %s23, 1
      %s505 = scalar_select %p504, %s23, 1
      %s506 = scalar_lea.vmem %s4, %s505
      %p507 = scmp.lt.s32.totalorder %s23, 1
      %s508 = scalar_select %p507, %s23, 1
      %s509 = scalar_lea.vmem %s5, %s508
      %p510 = scmp.lt.s32.totalorder %s23, 1
      %s511 = scalar_select %p510, %s23, 1
      %s512 = scalar_lea.vmem %s6, %s511
      %p513 = scmp.lt.s32.totalorder %s23, 1
      %s514 = scalar_select %p513, %s23, 1
      %s515 = scalar_lea.vmem %s7, %s514
      // Predicated region
      $region41: #{copilot_criterions_num_forward.1} parent=35 // pred_check
        %p516 = pneg %p161
      $region42: #{copilot_criterions_num_forward.1} parent=35 // pred_check_branch
        %518 = sbr.rel (%p516) target = $region44
      $region43: #{copilot_criterions_num_forward.1} parent=35 // pred_region
        _
      $region44: #{copilot_criterions_num_forward.1} parent=35 // pred_fallthru
        _
      // Predicated region
      $region45: #{copilot_criterions_num_forward.1} parent=35 // pred_check
        %p519 = pneg %p187
      $region46: #{copilot_criterions_num_forward.1} parent=35 // pred_check_branch
        %521 = sbr.rel (%p519) target = $region48
      $region47: #{copilot_criterions_num_forward.1} parent=35 // pred_region
        _
      $region48: #{copilot_criterions_num_forward.1} parent=35 // pred_fallthru
        _
      // Predicated region
      $region49: #{copilot_criterions_num_forward.1} parent=35 // pred_check
        %p522 = pneg %p213
      $region50: #{copilot_criterions_num_forward.1} parent=35 // pred_check_branch
        %524 = sbr.rel (%p522) target = $region52
      $region51: #{copilot_criterions_num_forward.1} parent=35 // pred_region
        _
      $region52: #{copilot_criterions_num_forward.1} parent=35 // pred_fallthru
        _
      // Predicated region
      $region53: #{copilot_criterions_num_forward.1} parent=35 // pred_check
        %p525 = pneg %p239
      $region54: #{copilot_criterions_num_forward.1} parent=35 // pred_check_branch
        %527 = sbr.rel (%p525) target = $region56
      $region55: #{copilot_criterions_num_forward.1} parent=35 // pred_region
        _
      $region56: #{copilot_criterions_num_forward.1} parent=35 // pred_fallthru
        _
    $region36: #{copilot_criterions_num_forward.1} parent=5 // pred_fallthru
      _
    %p528 = scmp.le.s32.totalorder 2, %s14
    // Predicated region
    $region57: #{copilot_criterions_num_forward.1} parent=5 // pred_check
      %p529 = pneg %p528
    $region58: #{copilot_criterions_num_forward.1} parent=5 // pred_check_branch
      %531 = sbr.rel (%p529) target = $region60
    $region59: #{copilot_criterions_num_forward.1} parent=5 // pred_region
      %s532 = ssub.s32 %s14, 2
      // Predicated region
      $region61: #{copilot_criterions_num_forward.1} parent=59 // pred_check
        %p533 = pneg %p167
      $region62: #{copilot_criterions_num_forward.1} parent=59 // pred_check_branch
        %535 = sbr.rel (%p533) target = $region64
      $region63: #{copilot_criterions_num_forward.1} parent=59 // pred_region
        %p536 = scmp.lt.s32.totalorder %s25, 1
        %s537 = scalar_select %p536, %s25, 1
        %s538 = scalar_lea.vmem %s4, %s537
      $region64: #{copilot_criterions_num_forward.1} parent=59 // pred_fallthru
        _
      // Predicated region
      $region65: #{copilot_criterions_num_forward.1} parent=59 // pred_check
        %p539 = pneg %p193
      $region66: #{copilot_criterions_num_forward.1} parent=59 // pred_check_branch
        %541 = sbr.rel (%p539) target = $region68
      $region67: #{copilot_criterions_num_forward.1} parent=59 // pred_region
        %p542 = scmp.lt.s32.totalorder %s25, 1
        %s543 = scalar_select %p542, %s25, 1
        %s544 = scalar_lea.vmem %s5, %s543
      $region68: #{copilot_criterions_num_forward.1} parent=59 // pred_fallthru
        _
      // Predicated region
      $region69: #{copilot_criterions_num_forward.1} parent=59 // pred_check
        %p545 = pneg %p219
      $region70: #{copilot_criterions_num_forward.1} parent=59 // pred_check_branch
        %547 = sbr.rel (%p545) target = $region72
      $region71: #{copilot_criterions_num_forward.1} parent=59 // pred_region
        %p548 = scmp.lt.s32.totalorder %s25, 1
        %s549 = scalar_select %p548, %s25, 1
        %s550 = scalar_lea.vmem %s6, %s549
      $region72: #{copilot_criterions_num_forward.1} parent=59 // pred_fallthru
        _
      // Predicated region
      $region73: #{copilot_criterions_num_forward.1} parent=59 // pred_check
        %p551 = pneg %p245
      $region74: #{copilot_criterions_num_forward.1} parent=59 // pred_check_branch
        %553 = sbr.rel (%p551) target = $region76
      $region75: #{copilot_criterions_num_forward.1} parent=59 // pred_region
        %p554 = scmp.lt.s32.totalorder %s25, 1
        %s555 = scalar_select %p554, %s25, 1
        %s556 = scalar_lea.vmem %s7, %s555
      $region76: #{copilot_criterions_num_forward.1} parent=59 // pred_fallthru
        _
    $region60: #{copilot_criterions_num_forward.1} parent=5 // pred_fallthru
      _
  $region6: #{copilot_criterions_num_forward.1} parent=0 // loop_footer
    %s18 = sadd.s32 1, %s14
  $region7: #{copilot_criterions_num_forward.1} parent=0 // loop_footer_branch
    %13 = sbr.rel target = $region3
  $region8: #{copilot_criterions_num_forward.1} parent=0 // loop_exit
    _

</llo_original>
